<compile_context>
chip_gen: v7x
topology: tpu7x:2x2x1
jax: 0.10.0
libtpu: 0.0.40
codegen_flags: <defaults>
</compile_context>

<pallas_src>
import jax
import jax.numpy as jnp
from jax.experimental import pallas as pl
from jax.experimental.pallas import tpu as pltpu


def _round_up(x, m):
    return ((x + m - 1) // m) * m


def _disc_kernel(ht_ref, hs_ref,
                 w1t_ref, w1s_ref, b1_ref,
                 w2_ref, b2_ref,
                 w3t_ref, b3_ref,
                 out_ref):
    # Activations arrive as f32 straight from HBM; cast to bf16 on the VPU right
    # before the MXU dots (f32 accumulation).
    ht = ht_ref[...].astype(jnp.bfloat16)
    hs = hs_ref[...].astype(jnp.bfloat16)

    # Layer 1: Linear(2h -> 4h) on the (virtually) concatenated input, then ReLU.
    # concat(h_t, h_s) @ W1 == h_t @ W1[:h] + h_s @ W1[h:]  (no in-kernel concat).
    x1 = (jnp.dot(ht, w1t_ref[...], preferred_element_type=jnp.float32)
          + jnp.dot(hs, w1s_ref[...], preferred_element_type=jnp.float32)
          + b1_ref[...])
    x1 = jnp.maximum(x1, 0.0).astype(jnp.bfloat16)   # ReLU in f32, carry bf16
    # (dropout p=0.3 -> identity in eval mode)

    # Layer 2: Linear(4h -> h), ReLU.  f32 accumulate / f32 ReLU (v5e-friendly).
    x2 = jnp.dot(x1, w2_ref[...], preferred_element_type=jnp.float32) + b2_ref[...]
    x2 = jnp.maximum(x2, 0.0)                          # f32 [TM, h_dim]

    # Layer 3: Linear(h -> 1).  K=h_dim, N=1 would badly underfill the MXU, so
    # route it through the VPU (broadcast multiply) + XLU (lane reduction).
    s = jnp.sum(x2 * w3t_ref[...], axis=-1, keepdims=True)        # [TM, 1] f32
    out_ref[...] = (s + b3_ref[0]).astype(out_ref.dtype)          # b3: SMEM scalar


def discriminator_forward(h_t, h_s, params, *, block_m=2048):
    """h_t, h_s: [N, h_dim] float32 -> logits [N, 1] float32."""
    w1, b1, w2, b2, w3, b3 = (params[k] for k in ("w1", "b1", "w2", "b2", "w3", "b3"))
    n, h_dim = h_t.shape
    d1 = 4 * h_dim
    assert h_s.shape == (n, h_dim)
    assert w1.shape == (2 * h_dim, d1), w1.shape
    assert w2.shape == (d1, h_dim), w2.shape
    assert w3.shape == (h_dim, 1), w3.shape            # layer-3 weight is a column

    # Batch tile: multiple of 8 sublanes, capped at block_m, and capped so the grid
    # has >= 2 steps whenever possible (v7x 2-TC sharding of the "parallel" axis).
    tm = _round_up(min(block_m, _round_up(max(pl.cdiv(n, 2), 1), 8)), 8)
    grid = (pl.cdiv(n, tm),)                           # ragged last block is fine:
                                                       # rows are independent, OOB
                                                       # output rows are discarded.

    # Weights are tiny: ship them as bf16 (halves their resident VMEM footprint);
    # activations stay f32 on the wire and are cast inside the kernel.
    w1t = w1[:h_dim, :].astype(jnp.bfloat16)           # split W1: concat -> 2 matmuls
    w1s = w1[h_dim:, :].astype(jnp.bfloat16)
    w2b = w2.astype(jnp.bfloat16)
    w3t = w3.reshape(1, h_dim).astype(jnp.float32)     # row vector for VPU layer-3
    b1r = b1.reshape(1, d1).astype(jnp.float32)
    b2r = b2.reshape(1, h_dim).astype(jnp.float32)
    b3s = b3.reshape(-1).astype(jnp.float32)           # (1,) SMEM scalar

    act_spec = pl.BlockSpec((tm, h_dim), lambda i: (i, 0))

    def resident(shape):
        # Constant index_map => fetched once, kept live in VMEM across the grid.
        return pl.BlockSpec(shape, lambda i: (0, 0))

    out = pl.pallas_call(
        _disc_kernel,
        out_shape=jax.ShapeDtypeStruct((n, 1), jnp.float32),
        grid=grid,
        in_specs=[
            act_spec,                    # h_t tile  (f32)
            act_spec,                    # h_s tile  (f32)
            resident((h_dim, d1)),       # W1[:h]    (bf16)
            resident((h_dim, d1)),       # W1[h:]    (bf16)
            resident((1, d1)),           # b1        (f32)
            resident((d1, h_dim)),       # W2        (bf16)
            resident((1, h_dim)),        # b2        (f32)
            resident((1, h_dim)),        # W3^T row  (f32)
            pl.BlockSpec(memory_space=pltpu.MemorySpace.SMEM),   # b3 scalar
        ],
        out_specs=pl.BlockSpec((tm, 1), lambda i: (i, 0)),
        compiler_params=pltpu.CompilerParams(
            dimension_semantics=("parallel",),
            vmem_limit_bytes=32 * 1024 * 1024),
    )(h_t, h_s, w1t, w1s, b1r, w2b, b2r, w3t, b3s)
    return out


def init_params(key, h_dim):
    """Deterministic parameter init for SimpleMLP([2h, 4h, h, 1])."""
    dims = [2 * h_dim, 4 * h_dim, h_dim, 1]
    ks = jax.random.split(key, 3)
    params = {}
    for i, (din, dout) in enumerate(zip(dims[:-1], dims[1:]), start=1):
        scale = 1.0 / jnp.sqrt(jnp.float32(din))
        params[f"w{i}"] = jax.random.normal(ks[i - 1], (din, dout), jnp.float32) * scale
        params[f"b{i}"] = jnp.zeros((1, dout), jnp.float32)
    return params


def _reference(h_t, h_s, params, matmul_dtype=jnp.float32):
    """Pure-JAX reference; matmul_dtype lets us mirror the kernel's bf16 operands."""
    w1 = params["w1"].astype(matmul_dtype)
    w2 = params["w2"].astype(matmul_dtype)
    h = jnp.concatenate([h_t, h_s], axis=1).astype(matmul_dtype)
    x = jnp.maximum(
        jnp.dot(h, w1, preferred_element_type=jnp.float32) + params["b1"], 0.0)
    x = jnp.maximum(
        jnp.dot(x.astype(matmul_dtype), w2, preferred_element_type=jnp.float32)
        + params["b2"], 0.0)
    return jnp.dot(x, params["w3"]) + params["b3"]


if __name__ == "__main__":
    key = jax.random.PRNGKey(0)
    k_p, k_t, k_s, k_t2, k_s2 = jax.random.split(key, 5)

    h_dim = 32
    batch = 8
    params = init_params(k_p, h_dim)
    h_t = jax.random.normal(k_t, (batch, h_dim), jnp.float32)
    h_s = jax.random.normal(k_s, (batch, h_dim), jnp.float32)

    forward = jax.jit(discriminator_forward)
    logits = jax.block_until_ready(forward(h_t, h_s, params))
    assert logits.shape == (batch, 1)

    # Tight check vs a reference that mirrors the kernel's bf16 matmul operands.
    ref_bf16 = _reference(h_t, h_s, params, matmul_dtype=jnp.bfloat16)
    assert jnp.max(jnp.abs(logits - ref_bf16)) < 3e-3

    # Loose check vs the pure-f32 PyTorch-equivalent math (bf16 rounding only).
    ref_f32 = _reference(h_t, h_s, params, matmul_dtype=jnp.float32)
    assert jnp.allclose(logits, ref_f32, atol=5e-2, rtol=5e-2)

    # Ragged / multi-step check: N not divisible by the batch tile, grid > 1
    # (exercises the cdiv grid and discarded OOB rows of the last block).
    n2 = 37
    h_t2 = jax.random.normal(k_t2, (n2, h_dim), jnp.float32)
    h_s2 = jax.random.normal(k_s2, (n2, h_dim), jnp.float32)
    small_forward = jax.jit(lambda a, b, p: discriminator_forward(a, b, p, block_m=16))
    logits2 = jax.block_until_ready(small_forward(h_t2, h_s2, params))
    assert logits2.shape == (n2, 1)
    ref2 = _reference(h_t2, h_s2, params, matmul_dtype=jnp.bfloat16)
    assert jnp.max(jnp.abs(logits2 - ref2)) < 3e-3

    print("KERNEL_OK")
</pallas_src>

<mosaic_0001>
module attributes {stable_mosaic.version = 11 : i64} {
  func.func @_disc_kernel(%arg0: i32, %arg1: memref<8x32xf32, #tpu.memory_space<vmem>>, %arg2: memref<8x32xf32, #tpu.memory_space<vmem>>, %arg3: memref<32x128xbf16, #tpu.memory_space<vmem>>, %arg4: memref<32x128xbf16, #tpu.memory_space<vmem>>, %arg5: memref<1x128xf32, #tpu.memory_space<vmem>>, %arg6: memref<128x32xbf16, #tpu.memory_space<vmem>>, %arg7: memref<1x32xf32, #tpu.memory_space<vmem>>, %arg8: memref<1x32xf32, #tpu.memory_space<vmem>>, %arg9: memref<1xf32, #tpu.memory_space<smem>>, %arg10: memref<8x1xf32, #tpu.memory_space<vmem>>) attributes {dimension_semantics = [#tpu.dimension_semantics<parallel>], iteration_bounds = array<i64: 1>, scalar_prefetch = 0 : i64, scratch_operands = 0 : i64, tpu.core_type = #tpu.core_type<tc>, window_params = [{transform_indices = @transform_0, window_bounds = array<i64: 8, 32>}, {transform_indices = @transform_1, window_bounds = array<i64: 8, 32>}, {pipeline_mode = #tpu.pipeline_mode<synchronous>, transform_indices = @transform_2, window_bounds = array<i64: 32, 128>}, {pipeline_mode = #tpu.pipeline_mode<synchronous>, transform_indices = @transform_3, window_bounds = array<i64: 32, 128>}, {pipeline_mode = #tpu.pipeline_mode<synchronous>, transform_indices = @transform_4, window_bounds = array<i64: 1, 128>}, {pipeline_mode = #tpu.pipeline_mode<synchronous>, transform_indices = @transform_5, window_bounds = array<i64: 128, 32>}, {pipeline_mode = #tpu.pipeline_mode<synchronous>, transform_indices = @transform_6, window_bounds = array<i64: 1, 32>}, {pipeline_mode = #tpu.pipeline_mode<synchronous>, transform_indices = @transform_7, window_bounds = array<i64: 1, 32>}, {transform_indices = @transform_8, window_bounds = array<i64: 1>}, {transform_indices = @transform_9, window_bounds = array<i64: 8, 1>}]} {
    %c0 = arith.constant 0 : index
    %c0_0 = arith.constant 0 : index
    %0 = vector.load %arg1[%c0, %c0_0] : memref<8x32xf32, #tpu.memory_space<vmem>>, vector<8x32xf32>
    %1 = arith.truncf %0 : vector<8x32xf32> to vector<8x32xbf16>
    %c0_1 = arith.constant 0 : index
    %c0_2 = arith.constant 0 : index
    %2 = vector.load %arg2[%c0_1, %c0_2] : memref<8x32xf32, #tpu.memory_space<vmem>>, vector<8x32xf32>
    %3 = arith.truncf %2 : vector<8x32xf32> to vector<8x32xbf16>
    %c0_3 = arith.constant 0 : index
    %c0_4 = arith.constant 0 : index
    %4 = vector.load %arg3[%c0_3, %c0_4] : memref<32x128xbf16, #tpu.memory_space<vmem>>, vector<32x128xbf16>
    %cst = arith.constant dense<0.000000e+00> : vector<8x128xf32>
    %5 = tpu.matmul %1, %4, %cst {dimension_numbers = #tpu.dot_dimension_numbers<[1], [0], [0], [1], [0, 0, 1, 1], [], []>} : vector<8x32xbf16>, vector<32x128xbf16>, vector<8x128xf32> -> vector<8x128xf32>
    %c0_5 = arith.constant 0 : index
    %c0_6 = arith.constant 0 : index
    %6 = vector.load %arg4[%c0_5, %c0_6] : memref<32x128xbf16, #tpu.memory_space<vmem>>, vector<32x128xbf16>
    %cst_7 = arith.constant dense<0.000000e+00> : vector<8x128xf32>
    %7 = tpu.matmul %3, %6, %cst_7 {dimension_numbers = #tpu.dot_dimension_numbers<[1], [0], [0], [1], [0, 0, 1, 1], [], []>} : vector<8x32xbf16>, vector<32x128xbf16>, vector<8x128xf32> -> vector<8x128xf32>
    %8 = arith.addf %5, %7 : vector<8x128xf32>
    %c0_8 = arith.constant 0 : index
    %c0_9 = arith.constant 0 : index
    %9 = vector.load %arg5[%c0_8, %c0_9] : memref<1x128xf32, #tpu.memory_space<vmem>>, vector<1x128xf32>
    %10 = vector.broadcast %9 : vector<1x128xf32> to vector<8x128xf32>
    %11 = arith.addf %8, %10 : vector<8x128xf32>
    %cst_10 = arith.constant 0.000000e+00 : f32
    %12 = vector.broadcast %cst_10 : f32 to vector<8x128xf32>
    %13 = arith.maximumf %11, %12 : vector<8x128xf32>
    %14 = arith.truncf %13 : vector<8x128xf32> to vector<8x128xbf16>
    %c0_11 = arith.constant 0 : index
    %c0_12 = arith.constant 0 : index
    %15 = vector.load %arg6[%c0_11, %c0_12] : memref<128x32xbf16, #tpu.memory_space<vmem>>, vector<128x32xbf16>
    %cst_13 = arith.constant dense<0.000000e+00> : vector<8x32xf32>
    %16 = tpu.matmul %14, %15, %cst_13 {dimension_numbers = #tpu.dot_dimension_numbers<[1], [0], [0], [1], [0, 0, 1, 1], [], []>} : vector<8x128xbf16>, vector<128x32xbf16>, vector<8x32xf32> -> vector<8x32xf32>
    %c0_14 = arith.constant 0 : index
    %c0_15 = arith.constant 0 : index
    %17 = vector.load %arg7[%c0_14, %c0_15] : memref<1x32xf32, #tpu.memory_space<vmem>>, vector<1x32xf32>
    %18 = vector.broadcast %17 : vector<1x32xf32> to vector<8x32xf32>
    %19 = arith.addf %16, %18 : vector<8x32xf32>
    %cst_16 = arith.constant 0.000000e+00 : f32
    %20 = vector.broadcast %cst_16 : f32 to vector<8x32xf32>
    %21 = arith.maximumf %19, %20 : vector<8x32xf32>
    %c0_17 = arith.constant 0 : index
    %c0_18 = arith.constant 0 : index
    %22 = vector.load %arg8[%c0_17, %c0_18] : memref<1x32xf32, #tpu.memory_space<vmem>>, vector<1x32xf32>
    %23 = vector.broadcast %22 : vector<1x32xf32> to vector<8x32xf32>
    %24 = arith.mulf %21, %23 : vector<8x32xf32>
    %cst_19 = arith.constant dense<0.000000e+00> : vector<8xf32>
    %25 = vector.multi_reduction <add>, %24, %cst_19 [1] : vector<8x32xf32> to vector<8xf32>
    %26 = vector.shape_cast %25 : vector<8xf32> to vector<8x1xf32>
    %c0_20 = arith.constant 0 : index
    %27 = memref.load %arg9[%c0_20] : memref<1xf32, #tpu.memory_space<smem>>
    %28 = vector.broadcast %27 : f32 to vector<8x1xf32>
    %29 = arith.addf %26, %28 : vector<8x1xf32>
    %c0_21 = arith.constant 0 : index
    %c0_22 = arith.constant 0 : index
    %30 = vector.load %arg10[%c0_21, %c0_22] : memref<8x1xf32, #tpu.memory_space<vmem>>, vector<8x1xf32>
    tpu.vector_store %arg10[%c0_21, %c0_22], %29 {strides = array<i32>} : memref<8x1xf32, #tpu.memory_space<vmem>>, vector<8x1xf32>,
    return
  }
  func.func @transform_0(%arg0: i32) -> (i32, i32) {
    %c0_i32 = arith.constant 0 : i32
    %c0_i32_0 = arith.constant 0 : i32
    return %arg0, %c0_i32 : i32, i32
  }
  func.func @transform_1(%arg0: i32) -> (i32, i32) {
    %c0_i32 = arith.constant 0 : i32
    %c0_i32_0 = arith.constant 0 : i32
    return %arg0, %c0_i32 : i32, i32
  }
  func.func @transform_2(%arg0: i32) -> (i32, i32) {
    %c0_i32 = arith.constant 0 : i32
    %c0_i32_0 = arith.constant 0 : i32
    %c0_i32_1 = arith.constant 0 : i32
    return %c0_i32, %c0_i32_0 : i32, i32
  }
  func.func @transform_3(%arg0: i32) -> (i32, i32) {
    %c0_i32 = arith.constant 0 : i32
    %c0_i32_0 = arith.constant 0 : i32
    %c0_i32_1 = arith.constant 0 : i32
    return %c0_i32, %c0_i32_0 : i32, i32
  }
  func.func @transform_4(%arg0: i32) -> (i32, i32) {
    %c0_i32 = arith.constant 0 : i32
    %c0_i32_0 = arith.constant 0 : i32
    %c0_i32_1 = arith.constant 0 : i32
    return %c0_i32, %c0_i32_0 : i32, i32
  }
  func.func @transform_5(%arg0: i32) -> (i32, i32) {
    %c0_i32 = arith.constant 0 : i32
    %c0_i32_0 = arith.constant 0 : i32
    %c0_i32_1 = arith.constant 0 : i32
    return %c0_i32, %c0_i32_0 : i32, i32
  }
  func.func @transform_6(%arg0: i32) -> (i32, i32) {
    %c0_i32 = arith.constant 0 : i32
    %c0_i32_0 = arith.constant 0 : i32
    %c0_i32_1 = arith.constant 0 : i32
    return %c0_i32, %c0_i32_0 : i32, i32
  }
  func.func @transform_7(%arg0: i32) -> (i32, i32) {
    %c0_i32 = arith.constant 0 : i32
    %c0_i32_0 = arith.constant 0 : i32
    %c0_i32_1 = arith.constant 0 : i32
    return %c0_i32, %c0_i32_0 : i32, i32
  }
  func.func @transform_8(%arg0: i32) -> i32 {
    %c0_i32 = arith.constant 0 : i32
    %c0_i32_0 = arith.constant 0 : i32
    return %c0_i32 : i32
  }
  func.func @transform_9(%arg0: i32) -> (i32, i32) {
    %c0_i32 = arith.constant 0 : i32
    %c0_i32_0 = arith.constant 0 : i32
    return %arg0, %c0_i32 : i32, i32
  }
}

</mosaic_0001>

<llo_original>
// kernel: discriminator_forward.1
$region0: #{discriminator_forward.1}
  #allocation0 [shape = 'u32[]', space=smem, size = 0x4, offset = 0x4, fixed_abs, tag = 'smem constant byte address 0x4 - core index']
  #allocation1 [shape = 'u32[144,128]{1,0:T(1,128)}', space=vmem, size = 0x12000, scoped, tag = 'internal scratch']
  #allocation2 [shape = 'f32[1]{0:T(128)S(6)}', space=smem, size = 0x200, scoped, tag = 'scoped memory for discriminator_forward.1']
  %s0 = inlined_call_operand.vmem [shape: f32[8,32], index: 0, kind: input, shape index: {}]
  %s1 = inlined_call_operand.vmem [shape: f32[8,32], index: 1, kind: input, shape index: {}]
  %s2 = inlined_call_operand.vmem [shape: bf16[32,128], index: 2, kind: input, shape index: {}]
  %s3 = inlined_call_operand.vmem [shape: bf16[32,128], index: 3, kind: input, shape index: {}]
  %s4 = inlined_call_operand.vmem [shape: f32[1,128], index: 4, kind: input, shape index: {}]
  %s5 = inlined_call_operand.vmem [shape: bf16[128,32], index: 5, kind: input, shape index: {}]
  %s6 = inlined_call_operand.vmem [shape: f32[1,32], index: 6, kind: input, shape index: {}]
  %s7 = inlined_call_operand.vmem [shape: f32[1,32], index: 7, kind: input, shape index: {}]
  %s8 = inlined_call_operand.<no memory space> [shape: f32[1], index: 8, kind: input, shape index: {}]
  %s9 = inlined_call_operand.vmem [shape: f32[8,1], index: 9, kind: output, shape index: {}]
  %s10 = sld [smem:[#allocation0]]
  $region46: #{discriminator_forward.1} parent=0
    _
  %s12 = ssub.s32 1, %s10
  %s13 = scalar_select 0, %s12, %s10
  %14 = sst [smem:[#allocation2]] %s8
  // Predicated region
  $region2: #{discriminator_forward.1} parent=0 // pred_check
    _
  $region3: #{discriminator_forward.1} parent=0 // pred_check_branch
    %16 = sbr.rel (0) target = $region5
  $region4: #{discriminator_forward.1} parent=0 // pred_region
    _
  $region5: #{discriminator_forward.1} parent=0 // pred_fallthru
    _
  // Predicated region
  $region6: #{discriminator_forward.1} parent=0 // pred_check
    _
  $region7: #{discriminator_forward.1} parent=0 // pred_check_branch
    %18 = sbr.rel (0) target = $region9
  $region8: #{discriminator_forward.1} parent=0 // pred_region
    _
  $region9: #{discriminator_forward.1} parent=0 // pred_fallthru
    _
  // Predicated region
  $region10: #{discriminator_forward.1} parent=0 // pred_check
    _
  $region11: #{discriminator_forward.1} parent=0 // pred_check_branch
    %20 = sbr.rel (0) target = $region13
  $region12: #{discriminator_forward.1} parent=0 // pred_region
    _
  $region13: #{discriminator_forward.1} parent=0 // pred_fallthru
    _
  // Predicated region
  $region14: #{discriminator_forward.1} parent=0 // pred_check
    _
  $region15: #{discriminator_forward.1} parent=0 // pred_check_branch
    %22 = sbr.rel (0) target = $region17
  $region16: #{discriminator_forward.1} parent=0 // pred_region
    _
  $region17: #{discriminator_forward.1} parent=0 // pred_fallthru
    _
  // Predicated region
  $region18: #{discriminator_forward.1} parent=0 // pred_check
    _
  $region19: #{discriminator_forward.1} parent=0 // pred_check_branch
    %24 = sbr.rel (0) target = $region21
  $region20: #{discriminator_forward.1} parent=0 // pred_region
    _
  $region21: #{discriminator_forward.1} parent=0 // pred_fallthru
    _
  // Predicated region
  $region22: #{discriminator_forward.1} parent=0 // pred_check
    _
  $region23: #{discriminator_forward.1} parent=0 // pred_check_branch
    %26 = sbr.rel (0) target = $region25
  $region24: #{discriminator_forward.1} parent=0 // pred_region
    _
  $region25: #{discriminator_forward.1} parent=0 // pred_fallthru
    _
  // Predicated region
  $region26: #{discriminator_forward.1} parent=0 // pred_check
    _
  $region27: #{discriminator_forward.1} parent=0 // pred_check_branch
    %28 = sbr.rel (0) target = $region29
  $region28: #{discriminator_forward.1} parent=0 // pred_region
    _
  $region29: #{discriminator_forward.1} parent=0 // pred_fallthru
    _
  // Predicated region
  $region30: #{discriminator_forward.1} parent=0 // pred_check
    _
  $region31: #{discriminator_forward.1} parent=0 // pred_check_branch
    %30 = sbr.rel (0) target = $region33
  $region32: #{discriminator_forward.1} parent=0 // pred_region
    _
  $region33: #{discriminator_forward.1} parent=0 // pred_fallthru
    _
  // Predicated region
  $region34: #{discriminator_forward.1} parent=0 // pred_check
    _
  $region35: #{discriminator_forward.1} parent=0 // pred_check_branch
    %32 = sbr.rel (0) target = $region37
  $region36: #{discriminator_forward.1} parent=0 // pred_region
    _
  $region37: #{discriminator_forward.1} parent=0 // pred_fallthru
    _
  %v34 = vld [vmem:[%s0] sm:$0xff]
  %v35 = vpack.c.bf16 %v34, %v34
  %v36 = vld [vmem:[%s1] sm:$0xff]
  %v37 = vpack.c.bf16 %v36, %v36
  %v38 = vld [vmem:[%s2] sm:$0xf]
  %v39 = vld [vmem:[%s2 + $0x4] sm:$0xf]
  %v40 = vld [vmem:[%s2 + $0x8] sm:$0xf]
  %v41 = vld [vmem:[%s2 + $0xc] sm:$0xf]
  %v42 = vld [vmem:[%s3] sm:$0xf]
  %v43 = vld [vmem:[%s3 + $0x4] sm:$0xf]
  %v44 = vld [vmem:[%s3 + $0x8] sm:$0xf]
  %v45 = vld [vmem:[%s3 + $0xc] sm:$0xf]
  %v50 = vunpack.c.l.b16 %v42
  %v51 = vunpack.c.l.b16 %v43
  %v52 = vunpack.c.l.b16 %v44
  %v53 = vunpack.c.l.b16 %v45
  %v54 = vpack.c.b16 %v51, %v50
  %v55 = vpack.c.b16 %v53, %v52
  %vm58 = vcmask 261120
  %v60 = vsel %vm58, %v37, 0
  %62 = vmatprep.subr.bf16.mxu0 0
  %63 = vmatpush1.bf16.msra.mxu0 %v54
  %64 = vmatprep.subr.bf16.mxu0 0
  %65 = vmatpush1.bf16.msra.mxu0 %v55
  %66 = vmatprep.subr.bf16.mxu0 0
  %67 = vmatpush1.bf16.msra.mxu0 0
  %68 = vmatprep.subr.bf16.mxu0 0
  %69 = vmatpush1.bf16.msra.mxu0 0
  %70 = vmatprep.subr.bf16.mxu0 0
  %71 = vmatpush1.bf16.msra.mxu0 0
  %72 = vmatprep.subr.bf16.mxu0 0
  %73 = vmatpush1.bf16.msra.mxu0 0
  %74 = vmatprep.subr.bf16.mxu0 0
  %75 = vmatpush1.bf16.msra.mxu0 0
  %76 = vmatprep.subr.bf16.mxu0 0
  %77 = vmatpush1.bf16.msra.mxu0 0
  %78 = vmatprep.subr.bf16.mxu0 0
  %79 = vmatpush1.bf16.msra.mxu0 0
  %80 = vmatprep.subr.bf16.mxu0 0
  %81 = vmatpush1.bf16.msra.mxu0 0
  %82 = vmatprep.subr.bf16.mxu0 0
  %83 = vmatpush1.bf16.msra.mxu0 0
  %84 = vmatprep.subr.bf16.mxu0 0
  %85 = vmatpush1.bf16.msra.mxu0 0
  %86 = vmatprep.subr.bf16.mxu0 0
  %87 = vmatpush1.bf16.msra.mxu0 0
  %88 = vmatprep.subr.bf16.mxu0 0
  %89 = vmatpush1.bf16.msra.mxu0 0
  %90 = vmatprep.subr.bf16.mxu0 0
  %91 = vmatpush1.bf16.msra.mxu0 0
  %92 = vmatprep.subr.bf16.mxu0 0
  %93 = vmatpush1.bf16.msra.mxu0 0
  %94 = vmatprep.mubr.bf16.mxu0 0
  %95 = vmatmul.mubr.bf16.gmra.mrb[0].mxu0 %v60
  %v96 = vpop.f32.mrb[0].mxu0
  %v97 = vadd.f32 0.0, %v96
  %v98 = vpop.f32.mrb[0].mxu0
  %v99 = vpop.f32.mrb[0].mxu0
  %v100 = vpop.f32.mrb[0].mxu0
  %101 = vdwg.mxu0
  %v106 = vunpack.c.l.b16 %v38
  %v107 = vunpack.c.l.b16 %v39
  %v108 = vunpack.c.l.b16 %v40
  %v109 = vunpack.c.l.b16 %v41
  %v110 = vpack.c.b16 %v107, %v106
  %v111 = vpack.c.b16 %v109, %v108
  %v115 = vsel %vm58, %v35, 0
  %117 = vmatprep.subr.bf16.mxu0 0
  %118 = vmatpush1.bf16.msra.mxu0 %v110
  %119 = vmatprep.subr.bf16.mxu0 0
  %120 = vmatpush1.bf16.msra.mxu0 %v111
  %121 = vmatprep.subr.bf16.mxu0 0
  %122 = vmatpush1.bf16.msra.mxu0 0
  %123 = vmatprep.subr.bf16.mxu0 0
  %124 = vmatpush1.bf16.msra.mxu0 0
  %125 = vmatprep.subr.bf16.mxu0 0
  %126 = vmatpush1.bf16.msra.mxu0 0
  %127 = vmatprep.subr.bf16.mxu0 0
  %128 = vmatpush1.bf16.msra.mxu0 0
  %129 = vmatprep.subr.bf16.mxu0 0
  %130 = vmatpush1.bf16.msra.mxu0 0
  %131 = vmatprep.subr.bf16.mxu0 0
  %132 = vmatpush1.bf16.msra.mxu0 0
  %133 = vmatprep.subr.bf16.mxu0 0
  %134 = vmatpush1.bf16.msra.mxu0 0
  %135 = vmatprep.subr.bf16.mxu0 0
  %136 = vmatpush1.bf16.msra.mxu0 0
  %137 = vmatprep.subr.bf16.mxu0 0
  %138 = vmatpush1.bf16.msra.mxu0 0
  %139 = vmatprep.subr.bf16.mxu0 0
  %140 = vmatpush1.bf16.msra.mxu0 0
  %141 = vmatprep.subr.bf16.mxu0 0
  %142 = vmatpush1.bf16.msra.mxu0 0
  %143 = vmatprep.subr.bf16.mxu0 0
  %144 = vmatpush1.bf16.msra.mxu0 0
  %145 = vmatprep.subr.bf16.mxu0 0
  %146 = vmatpush1.bf16.msra.mxu0 0
  %147 = vmatprep.subr.bf16.mxu0 0
  %148 = vmatpush1.bf16.msra.mxu0 0
  %149 = vmatprep.mubr.bf16.mxu0 0
  %150 = vmatmul.mubr.bf16.gmra.mrb[0].mxu0 %v115
  %v151 = vpop.f32.mrb[0].mxu0
  %v152 = vadd.f32 %v97, %v151
  %v153 = vpop.f32.mrb[0].mxu0
  %v154 = vpop.f32.mrb[0].mxu0
  %v155 = vpop.f32.mrb[0].mxu0
  %156 = vdwg.mxu0
  %v157 = vld [vmem:[%s4] sm:$0x1]
  %v159 = vlaneseq
  %v160 = vshrl.u32 %v159, 7
  %v161 = vsub.s32 0, %v160
  %v162 = vrot.slane %v157, %v161
  %v164 = vadd.f32 %v152, %v162
  %v165 = vmax.f32 %v164, 0.0
  %v166 = vpack.c.bf16 %v165, %v165
  %v167 = vld [vmem:[%s5] sm:$0xf]
  %v168 = vld [vmem:[%s5 + $0x4] sm:$0xf]
  %v169 = vld [vmem:[%s5 + $0x8] sm:$0xf]
  %v170 = vld [vmem:[%s5 + $0xc] sm:$0xf]
  %v171 = vld [vmem:[%s5 + $0x10] sm:$0xf]
  %v172 = vld [vmem:[%s5 + $0x14] sm:$0xf]
  %v173 = vld [vmem:[%s5 + $0x18] sm:$0xf]
  %v174 = vld [vmem:[%s5 + $0x1c] sm:$0xf]
  %v175 = vld [vmem:[%s5 + $0x20] sm:$0xf]
  %v176 = vld [vmem:[%s5 + $0x24] sm:$0xf]
  %v177 = vld [vmem:[%s5 + $0x28] sm:$0xf]
  %v178 = vld [vmem:[%s5 + $0x2c] sm:$0xf]
  %v179 = vld [vmem:[%s5 + $0x30] sm:$0xf]
  %v180 = vld [vmem:[%s5 + $0x34] sm:$0xf]
  %v181 = vld [vmem:[%s5 + $0x38] sm:$0xf]
  %v182 = vld [vmem:[%s5 + $0x3c] sm:$0xf]
  %v183 = vld [vmem:[%s6] sm:$0x1]
  %v185 = vlaneseq
  %v186 = vshrl.u32 %v185, 7
  %v187 = vsub.s32 0, %v186
  %v188 = vrot.slane %v183, %v187
  %v206 = vunpack.c.l.b16 %v167
  %v207 = vunpack.c.l.b16 %v168
  %v208 = vunpack.c.l.b16 %v169
  %v209 = vunpack.c.l.b16 %v170
  %v210 = vunpack.c.l.b16 %v171
  %v211 = vunpack.c.l.b16 %v172
  %v212 = vunpack.c.l.b16 %v173
  %v213 = vunpack.c.l.b16 %v174
  %v214 = vunpack.c.l.b16 %v175
  %v215 = vunpack.c.l.b16 %v176
  %v216 = vunpack.c.l.b16 %v177
  %v217 = vunpack.c.l.b16 %v178
  %v218 = vunpack.c.l.b16 %v179
  %v219 = vunpack.c.l.b16 %v180
  %v220 = vunpack.c.l.b16 %v181
  %v221 = vunpack.c.l.b16 %v182
  %v222 = vpack.c.b16 %v207, %v206
  %v223 = vpack.c.b16 %v209, %v208
  %v224 = vpack.c.b16 %v211, %v210
  %v225 = vpack.c.b16 %v213, %v212
  %v226 = vpack.c.b16 %v215, %v214
  %v227 = vpack.c.b16 %v217, %v216
  %v228 = vpack.c.b16 %v219, %v218
  %v229 = vpack.c.b16 %v221, %v220
  %238 = vmatprep.subr.bf16.mxu0 0
  %239 = vmatpush1.bf16.msra.mxu0 %v222
  %240 = vmatprep.subr.bf16.mxu0 0
  %241 = vmatpush1.bf16.msra.mxu0 %v223
  %242 = vmatprep.subr.bf16.mxu0 0
  %243 = vmatpush1.bf16.msra.mxu0 %v224
  %244 = vmatprep.subr.bf16.mxu0 0
  %245 = vmatpush1.bf16.msra.mxu0 %v225
  %246 = vmatprep.subr.bf16.mxu0 0
  %247 = vmatpush1.bf16.msra.mxu0 %v226
  %248 = vmatprep.subr.bf16.mxu0 0
  %249 = vmatpush1.bf16.msra.mxu0 %v227
  %250 = vmatprep.subr.bf16.mxu0 0
  %251 = vmatpush1.bf16.msra.mxu0 %v228
  %252 = vmatprep.subr.bf16.mxu0 0
  %253 = vmatpush1.bf16.msra.mxu0 %v229
  %254 = vmatprep.subr.bf16.mxu0 0
  %255 = vmatpush1.bf16.msra.mxu0 0
  %256 = vmatprep.subr.bf16.mxu0 0
  %257 = vmatpush1.bf16.msra.mxu0 0
  %258 = vmatprep.subr.bf16.mxu0 0
  %259 = vmatpush1.bf16.msra.mxu0 0
  %260 = vmatprep.subr.bf16.mxu0 0
  %261 = vmatpush1.bf16.msra.mxu0 0
  %262 = vmatprep.subr.bf16.mxu0 0
  %263 = vmatpush1.bf16.msra.mxu0 0
  %264 = vmatprep.subr.bf16.mxu0 0
  %265 = vmatpush1.bf16.msra.mxu0 0
  %266 = vmatprep.subr.bf16.mxu0 0
  %267 = vmatpush1.bf16.msra.mxu0 0
  %268 = vmatprep.subr.bf16.mxu0 0
  %269 = vmatpush1.bf16.msra.mxu0 0
  %270 = vmatprep.mubr.bf16.mxu0 0
  %271 = vmatmul.mubr.bf16.gmra.mrb[0].mxu0 %v166
  %v272 = vpop.f32.mrb[0].mxu0
  %v273 = vadd.f32 %v188, %v272
  %v274 = vpop.f32.mrb[0].mxu0
  %v275 = vpop.f32.mrb[0].mxu0
  %v276 = vpop.f32.mrb[0].mxu0
  %277 = vdwg.mxu0
  %v278 = vmax.f32 %v273, 0.0
  %v279 = vld [vmem:[%s7] sm:$0x1]
  %v281 = vlaneseq
  %v282 = vshrl.u32 %v281, 7
  %v283 = vsub.s32 0, %v282
  %v284 = vrot.slane %v279, %v283
  %v286 = vmul.f32 %v278, %v284
  %v287 = vsel %vm58, %v286, 0.0
  %288 = vadd.xlane.f32.xlu0 %v287
  %v289 = vpop.xlane.xlu0 %288
  %s290 = sld [smem:[#allocation2]]
  %v291 = vstv %s290
  %v292 = vadd.f32 %v289, %v291
  %vm293 = vcmask 7168
  %294 = vst.msk [vmem:[%s9] sm:$0xff] %vm293, %v292
  // Predicated region
  $region38: #{discriminator_forward.1} parent=0 // pred_check
    _
  $region39: #{discriminator_forward.1} parent=0 // pred_check_branch
    %296 = sbr.rel (0) target = $region41
  $region40: #{discriminator_forward.1} parent=0 // pred_region
    _
  $region41: #{discriminator_forward.1} parent=0 // pred_fallthru
    _
  // Predicated region
  $region42: #{discriminator_forward.1} parent=0 // pred_check
    _
  $region43: #{discriminator_forward.1} parent=0 // pred_check_branch
    %298 = sbr.rel (0) target = $region45
  $region44: #{discriminator_forward.1} parent=0 // pred_region
    _
  $region45: #{discriminator_forward.1} parent=0 // pred_fallthru
    _

</llo_original>
